<compile_context>
chip_gen: v5e
topology: v5e:2x2
jax: 0.10.0
libtpu: 0.0.40
codegen_flags: <defaults>
</compile_context>

<pallas_src>
import math

import jax
import jax.numpy as jnp
from jax.experimental import pallas as pl
from jax.experimental.pallas import tpu as pltpu

# ----------------------------- configuration -----------------------------
EMB = 32                     # _embsize
ATT_HEADS = 4
ATT_LAYERS = 1
ATT_FF = 48
KERNELS_MU = (1.0, 0.7, 0.3, -0.3, -0.7)
KERNELS_SIGMA = (0.1, 0.1, 0.1, 0.1, 0.1)
N_KERNELS = len(KERNELS_MU)
MAX_LENGTH = 120
USE_POS_ENCODING = True
USE_DIFF_POSENCODING = True
CHUNK_SIZE = 40
OVERLAP = 5
EXT_CHUNK = CHUNK_SIZE + 2 * OVERLAP     # 50
TOP_K_CHUNKS = 3
N_SAT_PARAMS = 16                        # 9 saturation params + N_KERNELS dense w, padded
OUT_LANES = 128                          # lane-dense score row (>= chunk_pieces)


# --------------------------- Pallas scoring kernel ---------------------------
def tk_score_kernel(params_ref, q_ref, dt_ref, qm_ref, seg_ref, qidf_ref, dlen_ref, out_ref):
    q = q_ref[...]        # (BB, Q, E)        pre-normalized query rows
    dt = dt_ref[...]      # (BB, E, CPCP)     pre-normalized + transposed doc rows (lane-dense)
    qm = qm_ref[...]      # (BB, Q, 1)        query mask
    seg = seg_ref[...]    # (BB, CPCP, L)     doc-mask-premasked block-diagonal pooling matrix
    qidf = qidf_ref[...]  # (BB, Q, 1)        query idfs
    dlen = dlen_ref[...]  # (BB, 1, L)        per-chunk doc length, lane-padded

    n_q = q.shape[1]

    # CosineMatrixAttention (both operands pre-normalized in the wrapper): MXU matmul.
    cos = jnp.einsum("bqe,bec->bqc", q, dt, preferred_element_type=jnp.float32)  # (BB, Q, CPCP)

    # All five Gaussian kernels, concatenated along the query-row (sublane) axis so
    # chunk pooling is a single MXU push instead of five tiny ones.
    rk = jnp.concatenate(
        [jnp.exp(-((cos - KERNELS_MU[k]) ** 2) *
                 (1.0 / (2.0 * KERNELS_SIGMA[k] * KERNELS_SIGMA[k])))
         for k in range(N_KERNELS)],
        axis=1)                                                                   # (BB, 5Q, CPCP)

    # Per-chunk sums; doc masking already folded into `seg` (masked/padded rows are zero).
    pooled = jnp.einsum("bqc,bcl->bql", rk, seg, preferred_element_type=jnp.float32)  # (BB, 5Q, L)
    logp = jnp.log(jnp.maximum(pooled, 1e-10))

    w1a, w1b, b1 = params_ref[0], params_ref[1], params_ref[2]
    w2a, w2b, b2 = params_ref[3], params_ref[4], params_ref[5]
    w3a, w3b, b3 = params_ref[6], params_ref[7], params_ref[8]

    sat1 = qidf * w1a + dlen * w1b + b1                               # (BB, Q, L)
    sat2 = pl.reciprocal(qidf * w2a + dlen * w2b + b2, approx=True)   # (BB, Q, L)
    sat3 = qidf * w3a + dlen * w3b + b3                               # (BB, Q, L)

    # clamp(min=1e-10) ** sat2 == exp(sat2 * log(clamped)); dense(per_kernel) folded in:
    #   sum_k w_k * (sat1 * powed_k - sat3) = sat1 * sum_k w_k*powed_k - sat3 * sum_k w_k
    wpow = None
    wsum = None
    for k in range(N_KERNELS):
        wk = params_ref[9 + k]
        powed = jnp.exp(sat2 * logp[:, k * n_q:(k + 1) * n_q, :])     # (BB, Q, L)
        wpow = wk * powed if wpow is None else wpow + wk * powed
        wsum = wk if wsum is None else wsum + wk

    acc = sat1 * wpow - sat3 * wsum                                   # (BB, Q, L)
    out_ref[...] = jnp.sum(acc * qm, axis=1, keepdims=True)           # (BB, 1, L) lane-dense store


def tk_chunk_scores(sat_params, q_norm, d_t, qm_all, seg_m, qidf_all, dlen_all, bb):
    Bp, Q, E = q_norm.shape
    CPCP = d_t.shape[2]
    return pl.pallas_call(
        tk_score_kernel,
        out_shape=jax.ShapeDtypeStruct((Bp, 1, OUT_LANES), jnp.float32),
        grid=(Bp // bb,),
        in_specs=[
            pl.BlockSpec(memory_space=pltpu.MemorySpace.SMEM),              # sat/dense params
            pl.BlockSpec((bb, Q, E), lambda b: (b, 0, 0)),                  # normalized query
            pl.BlockSpec((bb, E, CPCP), lambda b: (b, 0, 0)),               # normalized, transposed doc
            pl.BlockSpec((bb, Q, 1), lambda b: (b, 0, 0)),                  # query mask
            pl.BlockSpec((bb, CPCP, OUT_LANES), lambda b: (b, 0, 0)),       # premasked seg matrix
            pl.BlockSpec((bb, Q, 1), lambda b: (b, 0, 0)),                  # query idfs
            pl.BlockSpec((bb, 1, OUT_LANES), lambda b: (b, 0, 0)),          # per-chunk doc lengths
        ],
        out_specs=pl.BlockSpec((bb, 1, OUT_LANES), lambda b: (b, 0, 0)),
        compiler_params=pltpu.CompilerParams(dimension_semantics=("parallel",)),
    )(sat_params, q_norm, d_t, qm_all, seg_m, qidf_all, dlen_all)


def choose_block_batch(batch):
    # Amortize per-grid-step overhead while keeping >= 2 grid steps (v7x megacore balance).
    for bb in (16, 8, 4, 2):
        if batch >= 2 * bb and batch % 1 == 0:
            return bb
    return 1


# ------------------------------ plain-JAX glue ------------------------------
def get_positional_features(dim, max_len, min_ts=1.0, max_ts=1.0e4):
    timesteps = jnp.arange(max_len, dtype=jnp.float32)
    num_timescales = dim // 2
    ts_range = jnp.arange(num_timescales, dtype=jnp.float32)
    log_inc = math.log(float(max_ts) / float(min_ts)) / float(num_timescales - 1)
    inv_ts = min_ts * jnp.exp(ts_range * -log_inc)
    scaled = timesteps[:, None] * inv_ts[None, :]
    sinusoids = jnp.concatenate([jnp.sin(scaled), jnp.cos(scaled)], axis=1)
    if dim % 2 != 0:
        sinusoids = jnp.concatenate([sinusoids, jnp.zeros((max_len, 1), jnp.float32)], axis=1)
    return sinusoids[None, :, :]


def layer_norm(x, g, b, eps=1e-5):
    mu = jnp.mean(x, axis=-1, keepdims=True)
    var = jnp.mean((x - mu) ** 2, axis=-1, keepdims=True)
    return (x - mu) / jnp.sqrt(var + eps) * g + b


def mha(x, mask, lp):
    B, S, E = x.shape
    H, Dh = ATT_HEADS, EMB // ATT_HEADS
    qkv = x @ lp["in_w"].T + lp["in_b"]
    q, k, v = jnp.split(qkv, 3, axis=-1)
    reshape = lambda t: t.reshape(B, S, H, Dh).transpose(0, 2, 1, 3)
    q, k, v = reshape(q), reshape(k), reshape(v)
    scores = jnp.einsum("bhqd,bhkd->bhqk", q, k) / math.sqrt(Dh)
    scores = jnp.where(mask[:, None, None, :] > 0, scores, jnp.float32(-1e9))
    attn = jax.nn.softmax(scores, axis=-1)
    out = jnp.einsum("bhqk,bhkd->bhqd", attn, v)
    out = out.transpose(0, 2, 1, 3).reshape(B, S, E)
    return out @ lp["out_w"].T + lp["out_b"]


def encoder_layer(x, mask, lp):
    x = layer_norm(x + mha(x, mask, lp), lp["ln1_g"], lp["ln1_b"])
    ff = jax.nn.relu(x @ lp["ff1_w"].T + lp["ff1_b"]) @ lp["ff2_w"].T + lp["ff2_b"]
    return layer_norm(x + ff, lp["ln2_g"], lp["ln2_b"])


def forward_representation(emb, mask, params):
    emb = emb * mask[..., None]
    ctx = emb
    for lp in params["layers"]:
        ctx = encoder_layer(ctx, mask, lp)
    mixer = params["mixer"]
    return (mixer * emb + (1.0 - mixer) * ctx) * mask[..., None]


def tkl1_forward(params, query_emb, doc_emb, query_mask, doc_mask, query_idfs):
    B, Q, E = query_emb.shape
    if USE_POS_ENCODING:
        query_emb = query_emb + params["pos_q"][:, :Q, :]
    query_ctx = forward_representation(query_emb, query_mask, params)
    # hoist query row-normalization out of the kernel (identical for every chunk)
    q_norm = query_ctx / (jnp.sqrt(jnp.sum(query_ctx * query_ctx, axis=-1, keepdims=True)) + 1e-13)

    doc_len = doc_mask.shape[1]
    if doc_len > OVERLAP:
        needed = EXT_CHUNK - (doc_len - OVERLAP) % CHUNK_SIZE
    else:
        needed = EXT_CHUNK - OVERLAP - doc_len
    demb = jnp.pad(doc_emb, ((0, 0), (OVERLAP, needed), (0, 0)))
    dmsk = jnp.pad(doc_mask, ((0, 0), (OVERLAP, needed)))
    padded_len = demb.shape[1]
    chunk_pieces = (padded_len - EXT_CHUNK) // CHUNK_SIZE + 1
    assert chunk_pieces <= OUT_LANES

    # single-gather chunking (replaces Python-list jnp.stack of strided slices)
    starts = jnp.arange(chunk_pieces) * CHUNK_SIZE
    win_idx = starts[:, None] + jnp.arange(EXT_CHUNK)[None, :]          # (CP, EXT)
    chunked_docs = jnp.take(demb, win_idx, axis=1)                      # (B, CP, EXT, E)
    chunked_pad = jnp.take(dmsk, win_idx, axis=1)                       # (B, CP, EXT)

    P = B * chunk_pieces
    chunked_docs2 = chunked_docs.reshape(P, EXT_CHUNK, E)
    chunked_pad2 = chunked_pad.reshape(P, EXT_CHUNK)

    docs = chunked_docs2
    if USE_POS_ENCODING:
        docs = docs + params["pos_d"][:, :EXT_CHUNK, :]
    docs_ctx = forward_representation(docs, chunked_pad2, params)
    docs_unique = docs_ctx[:, OVERLAP:-OVERLAP, :]             # [P, CHUNK, E]
    dmask_unique = chunked_pad2[:, OVERLAP:-OVERLAP]           # [P, CHUNK]

    # lane-pack all chunks of a batch element and pre-normalize/transpose the doc tile
    CPC = chunk_pieces * CHUNK_SIZE
    CPC_PAD = max(OUT_LANES, ((CPC + 127) // 128) * 128)
    d_all = docs_unique.reshape(B, CPC, E).astype(jnp.float32)
    d_norm = d_all / (jnp.sqrt(jnp.sum(d_all * d_all, axis=-1, keepdims=True)) + 1e-13)
    d_norm = jnp.pad(d_norm, ((0, 0), (0, CPC_PAD - CPC), (0, 0)))
    d_t = jnp.transpose(d_norm, (0, 2, 1))                     # (B, E, CPC_PAD) lane-dense

    dm = dmask_unique.reshape(B, CPC).astype(jnp.float32)
    dm_pad = jnp.pad(dm, ((0, 0), (0, CPC_PAD - CPC)))         # (B, CPC_PAD)

    # premasked block-diagonal pooling matrix: doc position -> owning chunk lane
    row = jnp.arange(CPC_PAD)[:, None]
    col = jnp.arange(OUT_LANES)[None, :]
    seg_base = jnp.logical_and(row // CHUNK_SIZE == col, row < CPC).astype(jnp.float32)
    seg_m = dm_pad[:, :, None] * seg_base[None]                # (B, CPC_PAD, OUT_LANES)

    qm_all = query_mask[..., None].astype(jnp.float32)         # (B, Q, 1)
    qidf_all = query_idfs.astype(jnp.float32)                  # (B, Q, 1)

    # per-chunk doc lengths, precomputed (no in-kernel cross-lane reduce), lane-padded
    dlen = jnp.sum(dmask_unique.reshape(B, chunk_pieces, CHUNK_SIZE), axis=-1)      # (B, CP)
    dlen_all = jnp.pad(dlen, ((0, 0), (0, OUT_LANES - chunk_pieces)))[:, None, :]   # (B, 1, 128)
    packed_mask = (dlen > 0).astype(jnp.float32)                # (B, CP) — non-empty chunks

    sat_params = jnp.concatenate([
        params["sat1_w"].reshape(-1), params["sat1_b"].reshape(-1),
        params["sat2_w"].reshape(-1), params["sat2_b"].reshape(-1),
        params["sat3_w"].reshape(-1), params["sat3_b"].reshape(-1),
        params["dense_w"].reshape(-1),
    ]).astype(jnp.float32)
    sat_params = jnp.pad(sat_params, (0, N_SAT_PARAMS - sat_params.shape[0]))

    # block-batch BB elements per grid step; pad batch to a multiple of BB
    bb = choose_block_batch(B)
    B_pad = ((B + bb - 1) // bb) * bb
    pad_b = B_pad - B
    kin = [q_norm.astype(jnp.float32), d_t, qm_all, seg_m, qidf_all,
           dlen_all.astype(jnp.float32)]
    if pad_b:
        kin = [jnp.pad(x, ((0, pad_b),) + ((0, 0),) * (x.ndim - 1)) for x in kin]

    score_rows = tk_chunk_scores(sat_params, *kin, bb)
    chunk_scores = score_rows[:B, 0, :chunk_pieces]             # (B, chunk_pieces)

    # scatter semantics: non-packed (empty) chunks keep a score of exactly 0
    chunk_scores = chunk_scores * packed_mask

    score = chunk_scores
    if chunk_pieces < TOP_K_CHUNKS:
        score = jnp.pad(score, ((0, 0), (0, TOP_K_CHUNKS - chunk_pieces)))
    score = jnp.where(score == 0.0, jnp.float32(-10000.0), score)
    score, _ = jax.lax.top_k(score, TOP_K_CHUNKS)
    score = jnp.where(score == -10000.0, jnp.float32(0.0), score)
    score = jnp.sum(score * params["chunk_scoring"], axis=1)
    return score


tkl1_forward_jit = jax.jit(tkl1_forward)


# ------------------------- deterministic parameter init -------------------------
def init_params(key):
    keys = jax.random.split(key, 8 + ATT_LAYERS)

    def uniform(k, shape, bound):
        return jax.random.uniform(k, shape, jnp.float32, -bound, bound)

    layers = []
    for l in range(ATT_LAYERS):
        lk = jax.random.split(keys[l], 6)
        be = 1.0 / math.sqrt(EMB)
        bf = 1.0 / math.sqrt(ATT_FF)
        layers.append(dict(
            in_w=uniform(lk[0], (3 * EMB, EMB), be), in_b=jnp.zeros((3 * EMB,), jnp.float32),
            out_w=uniform(lk[1], (EMB, EMB), be), out_b=jnp.zeros((EMB,), jnp.float32),
            ff1_w=uniform(lk[2], (ATT_FF, EMB), be), ff1_b=uniform(lk[3], (ATT_FF,), be),
            ff2_w=uniform(lk[4], (EMB, ATT_FF), bf), ff2_b=uniform(lk[5], (EMB,), bf),
            ln1_g=jnp.ones((EMB,), jnp.float32), ln1_b=jnp.zeros((EMB,), jnp.float32),
            ln2_g=jnp.ones((EMB,), jnp.float32), ln2_b=jnp.zeros((EMB,), jnp.float32),
        ))

    b2 = 1.0 / math.sqrt(2.0)
    pos_q = get_positional_features(EMB, 30)
    if USE_DIFF_POSENCODING:
        pos_d = get_positional_features(EMB, MAX_LENGTH + 500)[:, 500:, :]
    else:
        pos_d = pos_q
    return dict(
        layers=layers,
        mixer=jnp.full((1,), 0.5, jnp.float32),
        sat1_w=uniform(keys[-6], (1, 2), b2), sat1_b=jnp.full((1,), 100.0, jnp.float32),
        sat2_w=uniform(keys[-5], (1, 2), b2), sat2_b=jnp.full((1,), 100.0, jnp.float32),
        sat3_w=uniform(keys[-4], (1, 2), b2), sat3_b=jnp.full((1,), 100.0, jnp.float32),
        dense_w=uniform(keys[-3], (1, N_KERNELS), 0.014),
        chunk_scoring=jnp.ones((1, TOP_K_CHUNKS), jnp.float32),
        pos_q=pos_q, pos_d=pos_d,
    )


# ----------------------------------- main -----------------------------------
if __name__ == "__main__":
    key = jax.random.PRNGKey(0)
    pkey, dkey = jax.random.split(key)
    params = init_params(pkey)

    B, Q, DLEN = 2, 8, 115
    k1, k2, k3 = jax.random.split(dkey, 3)
    query_embeddings = jax.random.normal(k1, (B, Q, EMB), jnp.float32)
    document_embeddings = jax.random.normal(k2, (B, DLEN, EMB), jnp.float32)
    query_pad_oov_mask = jnp.stack([
        jnp.concatenate([jnp.ones(6), jnp.zeros(2)]),
        jnp.ones(8),
    ]).astype(jnp.float32)
    document_pad_oov_mask = jnp.stack([
        jnp.ones(DLEN),
        jnp.concatenate([jnp.ones(50), jnp.zeros(DLEN - 50)]),   # third chunk empty
    ]).astype(jnp.float32)
    query_idfs = jax.random.uniform(k3, (B, Q, 1), jnp.float32, 0.0, 3.0)

    score = tkl1_forward_jit(params, query_embeddings, document_embeddings,
                             query_pad_oov_mask, document_pad_oov_mask, query_idfs)
    jax.block_until_ready(score)
    assert score.shape == (B,)
    assert bool(jnp.all(jnp.isfinite(score)))
    print("KERNEL_OK")
</pallas_src>

<mosaic_0001>
module attributes {stable_mosaic.version = 11 : i64} {
  func.func @tk_score_kernel(%arg0: i32, %arg1: memref<16xf32, #tpu.memory_space<smem>>, %arg2: memref<1x8x32xf32, #tpu.memory_space<vmem>>, %arg3: memref<1x32x128xf32, #tpu.memory_space<vmem>>, %arg4: memref<1x8x1xf32, #tpu.memory_space<vmem>>, %arg5: memref<1x128x128xf32, #tpu.memory_space<vmem>>, %arg6: memref<1x8x1xf32, #tpu.memory_space<vmem>>, %arg7: memref<1x1x128xf32, #tpu.memory_space<vmem>>, %arg8: memref<1x1x128xf32, #tpu.memory_space<vmem>>) attributes {dimension_semantics = [#tpu.dimension_semantics<parallel>], iteration_bounds = array<i64: 2>, scalar_prefetch = 0 : i64, scratch_operands = 0 : i64, tpu.core_type = #tpu.core_type<tc>, window_params = [{transform_indices = @transform_0, window_bounds = array<i64: 16>}, {transform_indices = @transform_1, window_bounds = array<i64: 1, 8, 32>}, {transform_indices = @transform_2, window_bounds = array<i64: 1, 32, 128>}, {transform_indices = @transform_3, window_bounds = array<i64: 1, 8, 1>}, {transform_indices = @transform_4, window_bounds = array<i64: 1, 128, 128>}, {transform_indices = @transform_5, window_bounds = array<i64: 1, 8, 1>}, {transform_indices = @transform_6, window_bounds = array<i64: 1, 1, 128>}, {transform_indices = @transform_7, window_bounds = array<i64: 1, 1, 128>}]} {
    %c0 = arith.constant 0 : index
    %c0_0 = arith.constant 0 : index
    %c0_1 = arith.constant 0 : index
    %0 = vector.load %arg2[%c0, %c0_0, %c0_1] : memref<1x8x32xf32, #tpu.memory_space<vmem>>, vector<1x8x32xf32>
    %c0_2 = arith.constant 0 : index
    %c0_3 = arith.constant 0 : index
    %c0_4 = arith.constant 0 : index
    %1 = vector.load %arg3[%c0_2, %c0_3, %c0_4] : memref<1x32x128xf32, #tpu.memory_space<vmem>>, vector<1x32x128xf32>
    %c0_5 = arith.constant 0 : index
    %c0_6 = arith.constant 0 : index
    %c0_7 = arith.constant 0 : index
    %2 = vector.load %arg4[%c0_5, %c0_6, %c0_7] : memref<1x8x1xf32, #tpu.memory_space<vmem>>, vector<1x8x1xf32>
    %c0_8 = arith.constant 0 : index
    %c0_9 = arith.constant 0 : index
    %c0_10 = arith.constant 0 : index
    %3 = vector.load %arg5[%c0_8, %c0_9, %c0_10] : memref<1x128x128xf32, #tpu.memory_space<vmem>>, vector<1x128x128xf32>
    %c0_11 = arith.constant 0 : index
    %c0_12 = arith.constant 0 : index
    %c0_13 = arith.constant 0 : index
    %4 = vector.load %arg6[%c0_11, %c0_12, %c0_13] : memref<1x8x1xf32, #tpu.memory_space<vmem>>, vector<1x8x1xf32>
    %c0_14 = arith.constant 0 : index
    %c0_15 = arith.constant 0 : index
    %c0_16 = arith.constant 0 : index
    %5 = vector.load %arg7[%c0_14, %c0_15, %c0_16] : memref<1x1x128xf32, #tpu.memory_space<vmem>>, vector<1x1x128xf32>
    "tpu.trace_start"() <{level = 10 : i32, message = "bqe,bec->bqc"}> : () -> ()
    %cst = arith.constant dense<0.000000e+00> : vector<1x8x128xf32>
    %6 = tpu.matmul %0, %1, %cst {dimension_numbers = #tpu.dot_dimension_numbers<[2], [1], [1], [2], [0, 0, 0, 1, 1, 2], [0], [0]>} : vector<1x8x32xf32>, vector<1x32x128xf32>, vector<1x8x128xf32> -> vector<1x8x128xf32>
    "tpu.trace_stop"() : () -> ()
    %cst_17 = arith.constant 1.000000e+00 : f32
    %7 = vector.broadcast %cst_17 : f32 to vector<1x8x128xf32>
    %8 = arith.subf %6, %7 : vector<1x8x128xf32>
    %9 = arith.mulf %8, %8 : vector<1x8x128xf32>
    %cst_18 = arith.constant 0.000000e+00 : f32
    %10 = vector.broadcast %cst_18 : f32 to vector<1x8x128xf32>
    %11 = arith.subf %10, %9 : vector<1x8x128xf32>
    %cst_19 = arith.constant 5.000000e+01 : f32
    %12 = vector.broadcast %cst_19 : f32 to vector<1x8x128xf32>
    %13 = arith.mulf %11, %12 : vector<1x8x128xf32>
    %14 = math.exp %13 : vector<1x8x128xf32>
    %cst_20 = arith.constant 0.699999988 : f32
    %15 = vector.broadcast %cst_20 : f32 to vector<1x8x128xf32>
    %16 = arith.subf %6, %15 : vector<1x8x128xf32>
    %17 = arith.mulf %16, %16 : vector<1x8x128xf32>
    %cst_21 = arith.constant 0.000000e+00 : f32
    %18 = vector.broadcast %cst_21 : f32 to vector<1x8x128xf32>
    %19 = arith.subf %18, %17 : vector<1x8x128xf32>
    %cst_22 = arith.constant 5.000000e+01 : f32
    %20 = vector.broadcast %cst_22 : f32 to vector<1x8x128xf32>
    %21 = arith.mulf %19, %20 : vector<1x8x128xf32>
    %22 = math.exp %21 : vector<1x8x128xf32>
    %cst_23 = arith.constant 3.000000e-01 : f32
    %23 = vector.broadcast %cst_23 : f32 to vector<1x8x128xf32>
    %24 = arith.subf %6, %23 : vector<1x8x128xf32>
    %25 = arith.mulf %24, %24 : vector<1x8x128xf32>
    %cst_24 = arith.constant 0.000000e+00 : f32
    %26 = vector.broadcast %cst_24 : f32 to vector<1x8x128xf32>
    %27 = arith.subf %26, %25 : vector<1x8x128xf32>
    %cst_25 = arith.constant 5.000000e+01 : f32
    %28 = vector.broadcast %cst_25 : f32 to vector<1x8x128xf32>
    %29 = arith.mulf %27, %28 : vector<1x8x128xf32>
    %30 = math.exp %29 : vector<1x8x128xf32>
    %cst_26 = arith.constant -3.000000e-01 : f32
    %31 = vector.broadcast %cst_26 : f32 to vector<1x8x128xf32>
    %32 = arith.subf %6, %31 : vector<1x8x128xf32>
    %33 = arith.mulf %32, %32 : vector<1x8x128xf32>
    %cst_27 = arith.constant 0.000000e+00 : f32
    %34 = vector.broadcast %cst_27 : f32 to vector<1x8x128xf32>
    %35 = arith.subf %34, %33 : vector<1x8x128xf32>
    %cst_28 = arith.constant 5.000000e+01 : f32
    %36 = vector.broadcast %cst_28 : f32 to vector<1x8x128xf32>
    %37 = arith.mulf %35, %36 : vector<1x8x128xf32>
    %38 = math.exp %37 : vector<1x8x128xf32>
    %cst_29 = arith.constant -0.699999988 : f32
    %39 = vector.broadcast %cst_29 : f32 to vector<1x8x128xf32>
    %40 = arith.subf %6, %39 : vector<1x8x128xf32>
    %41 = arith.mulf %40, %40 : vector<1x8x128xf32>
    %cst_30 = arith.constant 0.000000e+00 : f32
    %42 = vector.broadcast %cst_30 : f32 to vector<1x8x128xf32>
    %43 = arith.subf %42, %41 : vector<1x8x128xf32>
    %cst_31 = arith.constant 5.000000e+01 : f32
    %44 = vector.broadcast %cst_31 : f32 to vector<1x8x128xf32>
    %45 = arith.mulf %43, %44 : vector<1x8x128xf32>
    %46 = math.exp %45 : vector<1x8x128xf32>
    %47 = tpu.concatenate %14, %22, %30, %38, %46 in 1 : vector<1x8x128xf32>, vector<1x8x128xf32>, vector<1x8x128xf32>, vector<1x8x128xf32>, vector<1x8x128xf32> -> vector<1x40x128xf32>
    "tpu.trace_start"() <{level = 10 : i32, message = "bqc,bcl->bql"}> : () -> ()
    %cst_32 = arith.constant dense<0.000000e+00> : vector<1x40x128xf32>
    %48 = tpu.matmul %47, %3, %cst_32 {dimension_numbers = #tpu.dot_dimension_numbers<[2], [1], [1], [2], [0, 0, 0, 1, 1, 2], [0], [0]>} : vector<1x40x128xf32>, vector<1x128x128xf32>, vector<1x40x128xf32> -> vector<1x40x128xf32>
    "tpu.trace_stop"() : () -> ()
    %cst_33 = arith.constant 1.000000e-10 : f32
    %49 = vector.broadcast %cst_33 : f32 to vector<1x40x128xf32>
    %50 = arith.maximumf %48, %49 : vector<1x40x128xf32>
    %51 = math.log %50 : vector<1x40x128xf32>
    %c0_34 = arith.constant 0 : index
    %52 = memref.load %arg1[%c0_34] : memref<16xf32, #tpu.memory_space<smem>>
    %c1 = arith.constant 1 : index
    %53 = memref.load %arg1[%c1] : memref<16xf32, #tpu.memory_space<smem>>
    %c2 = arith.constant 2 : index
    %54 = memref.load %arg1[%c2] : memref<16xf32, #tpu.memory_space<smem>>
    %c3 = arith.constant 3 : index
    %55 = memref.load %arg1[%c3] : memref<16xf32, #tpu.memory_space<smem>>
    %c4 = arith.constant 4 : index
    %56 = memref.load %arg1[%c4] : memref<16xf32, #tpu.memory_space<smem>>
    %c5 = arith.constant 5 : index
    %57 = memref.load %arg1[%c5] : memref<16xf32, #tpu.memory_space<smem>>
    %c6 = arith.constant 6 : index
    %58 = memref.load %arg1[%c6] : memref<16xf32, #tpu.memory_space<smem>>
    %c7 = arith.constant 7 : index
    %59 = memref.load %arg1[%c7] : memref<16xf32, #tpu.memory_space<smem>>
    %c8 = arith.constant 8 : index
    %60 = memref.load %arg1[%c8] : memref<16xf32, #tpu.memory_space<smem>>
    %61 = vector.broadcast %52 : f32 to vector<1x8x1xf32>
    %62 = arith.mulf %4, %61 : vector<1x8x1xf32>
    %63 = vector.broadcast %53 : f32 to vector<1x1x128xf32>
    %64 = arith.mulf %5, %63 : vector<1x1x128xf32>
    %65 = vector.broadcast %62 : vector<1x8x1xf32> to vector<1x8x128xf32>
    %66 = vector.broadcast %64 : vector<1x1x128xf32> to vector<1x8x128xf32>
    %67 = arith.addf %65, %66 : vector<1x8x128xf32>
    %68 = vector.broadcast %54 : f32 to vector<1x8x128xf32>
    %69 = arith.addf %67, %68 : vector<1x8x128xf32>
    %70 = vector.broadcast %55 : f32 to vector<1x8x1xf32>
    %71 = arith.mulf %4, %70 : vector<1x8x1xf32>
    %72 = vector.broadcast %56 : f32 to vector<1x1x128xf32>
    %73 = arith.mulf %5, %72 : vector<1x1x128xf32>
    %74 = vector.broadcast %71 : vector<1x8x1xf32> to vector<1x8x128xf32>
    %75 = vector.broadcast %73 : vector<1x1x128xf32> to vector<1x8x128xf32>
    %76 = arith.addf %74, %75 : vector<1x8x128xf32>
    %77 = vector.broadcast %57 : f32 to vector<1x8x128xf32>
    %78 = arith.addf %76, %77 : vector<1x8x128xf32>
    %79 = tpu.reciprocal %78 {approx = true} : vector<1x8x128xf32> -> vector<1x8x128xf32>
    %80 = vector.broadcast %58 : f32 to vector<1x8x1xf32>
    %81 = arith.mulf %4, %80 : vector<1x8x1xf32>
    %82 = vector.broadcast %59 : f32 to vector<1x1x128xf32>
    %83 = arith.mulf %5, %82 : vector<1x1x128xf32>
    %84 = vector.broadcast %81 : vector<1x8x1xf32> to vector<1x8x128xf32>
    %85 = vector.broadcast %83 : vector<1x1x128xf32> to vector<1x8x128xf32>
    %86 = arith.addf %84, %85 : vector<1x8x128xf32>
    %87 = vector.broadcast %60 : f32 to vector<1x8x128xf32>
    %88 = arith.addf %86, %87 : vector<1x8x128xf32>
    %c9 = arith.constant 9 : index
    %89 = memref.load %arg1[%c9] : memref<16xf32, #tpu.memory_space<smem>>
    %90 = vector.extract_strided_slice %51 {offsets = [0, 0, 0], sizes = [1, 8, 128], strides = [1, 1, 1]} : vector<1x40x128xf32> to vector<1x8x128xf32>
    %91 = arith.mulf %79, %90 : vector<1x8x128xf32>
    %92 = math.exp %91 : vector<1x8x128xf32>
    %93 = vector.broadcast %89 : f32 to vector<1x8x128xf32>
    %94 = arith.mulf %93, %92 : vector<1x8x128xf32>
    %c10 = arith.constant 10 : index
    %95 = memref.load %arg1[%c10] : memref<16xf32, #tpu.memory_space<smem>>
    %96 = vector.extract_strided_slice %51 {offsets = [0, 8, 0], sizes = [1, 8, 128], strides = [1, 1, 1]} : vector<1x40x128xf32> to vector<1x8x128xf32>
    %97 = arith.mulf %79, %96 : vector<1x8x128xf32>
    %98 = math.exp %97 : vector<1x8x128xf32>
    %99 = vector.broadcast %95 : f32 to vector<1x8x128xf32>
    %100 = arith.mulf %99, %98 : vector<1x8x128xf32>
    %101 = arith.addf %94, %100 : vector<1x8x128xf32>
    %102 = arith.addf %89, %95 : f32
    %c11 = arith.constant 11 : index
    %103 = memref.load %arg1[%c11] : memref<16xf32, #tpu.memory_space<smem>>
    %104 = vector.extract_strided_slice %51 {offsets = [0, 16, 0], sizes = [1, 8, 128], strides = [1, 1, 1]} : vector<1x40x128xf32> to vector<1x8x128xf32>
    %105 = arith.mulf %79, %104 : vector<1x8x128xf32>
    %106 = math.exp %105 : vector<1x8x128xf32>
    %107 = vector.broadcast %103 : f32 to vector<1x8x128xf32>
    %108 = arith.mulf %107, %106 : vector<1x8x128xf32>
    %109 = arith.addf %101, %108 : vector<1x8x128xf32>
    %110 = arith.addf %102, %103 : f32
    %c12 = arith.constant 12 : index
    %111 = memref.load %arg1[%c12] : memref<16xf32, #tpu.memory_space<smem>>
    %112 = vector.extract_strided_slice %51 {offsets = [0, 24, 0], sizes = [1, 8, 128], strides = [1, 1, 1]} : vector<1x40x128xf32> to vector<1x8x128xf32>
    %113 = arith.mulf %79, %112 : vector<1x8x128xf32>
    %114 = math.exp %113 : vector<1x8x128xf32>
    %115 = vector.broadcast %111 : f32 to vector<1x8x128xf32>
    %116 = arith.mulf %115, %114 : vector<1x8x128xf32>
    %117 = arith.addf %109, %116 : vector<1x8x128xf32>
    %118 = arith.addf %110, %111 : f32
    %c13 = arith.constant 13 : index
    %119 = memref.load %arg1[%c13] : memref<16xf32, #tpu.memory_space<smem>>
    %120 = vector.extract_strided_slice %51 {offsets = [0, 32, 0], sizes = [1, 8, 128], strides = [1, 1, 1]} : vector<1x40x128xf32> to vector<1x8x128xf32>
    %121 = arith.mulf %79, %120 : vector<1x8x128xf32>
    %122 = math.exp %121 : vector<1x8x128xf32>
    %123 = vector.broadcast %119 : f32 to vector<1x8x128xf32>
    %124 = arith.mulf %123, %122 : vector<1x8x128xf32>
    %125 = arith.addf %117, %124 : vector<1x8x128xf32>
    %126 = arith.addf %118, %119 : f32
    %127 = arith.mulf %69, %125 : vector<1x8x128xf32>
    %128 = vector.broadcast %126 : f32 to vector<1x8x128xf32>
    %129 = arith.mulf %88, %128 : vector<1x8x128xf32>
    %130 = arith.subf %127, %129 : vector<1x8x128xf32>
    %131 = vector.broadcast %2 : vector<1x8x1xf32> to vector<1x8x128xf32>
    %132 = arith.mulf %130, %131 : vector<1x8x128xf32>
    %cst_35 = arith.constant dense<0.000000e+00> : vector<1x128xf32>
    %133 = vector.multi_reduction <add>, %132, %cst_35 [1] : vector<1x8x128xf32> to vector<1x128xf32>
    %134 = vector.shape_cast %133 : vector<1x128xf32> to vector<1x1x128xf32>
    %c0_36 = arith.constant 0 : index
    %c0_37 = arith.constant 0 : index
    %c0_38 = arith.constant 0 : index
    %135 = vector.load %arg8[%c0_36, %c0_37, %c0_38] : memref<1x1x128xf32, #tpu.memory_space<vmem>>, vector<1x1x128xf32>
    tpu.vector_store %arg8[%c0_36, %c0_37, %c0_38], %134 {strides = array<i32>} : memref<1x1x128xf32, #tpu.memory_space<vmem>>, vector<1x1x128xf32>,
    return
  }
  func.func @transform_0(%arg0: i32) -> i32 {
    %c0_i32 = arith.constant 0 : i32
    %c0_i32_0 = arith.constant 0 : i32
    return %c0_i32 : i32
  }
  func.func @transform_1(%arg0: i32) -> (i32, i32, i32) {
    %c0_i32 = arith.constant 0 : i32
    %c0_i32_0 = arith.constant 0 : i32
    %c0_i32_1 = arith.constant 0 : i32
    return %arg0, %c0_i32, %c0_i32_0 : i32, i32, i32
  }
  func.func @transform_2(%arg0: i32) -> (i32, i32, i32) {
    %c0_i32 = arith.constant 0 : i32
    %c0_i32_0 = arith.constant 0 : i32
    %c0_i32_1 = arith.constant 0 : i32
    return %arg0, %c0_i32, %c0_i32_0 : i32, i32, i32
  }
  func.func @transform_3(%arg0: i32) -> (i32, i32, i32) {
    %c0_i32 = arith.constant 0 : i32
    %c0_i32_0 = arith.constant 0 : i32
    %c0_i32_1 = arith.constant 0 : i32
    return %arg0, %c0_i32, %c0_i32_0 : i32, i32, i32
  }
  func.func @transform_4(%arg0: i32) -> (i32, i32, i32) {
    %c0_i32 = arith.constant 0 : i32
    %c0_i32_0 = arith.constant 0 : i32
    %c0_i32_1 = arith.constant 0 : i32
    return %arg0, %c0_i32, %c0_i32_0 : i32, i32, i32
  }
  func.func @transform_5(%arg0: i32) -> (i32, i32, i32) {
    %c0_i32 = arith.constant 0 : i32
    %c0_i32_0 = arith.constant 0 : i32
    %c0_i32_1 = arith.constant 0 : i32
    return %arg0, %c0_i32, %c0_i32_0 : i32, i32, i32
  }
  func.func @transform_6(%arg0: i32) -> (i32, i32, i32) {
    %c0_i32 = arith.constant 0 : i32
    %c0_i32_0 = arith.constant 0 : i32
    %c0_i32_1 = arith.constant 0 : i32
    return %arg0, %c0_i32, %c0_i32_0 : i32, i32, i32
  }
  func.func @transform_7(%arg0: i32) -> (i32, i32, i32) {
    %c0_i32 = arith.constant 0 : i32
    %c0_i32_0 = arith.constant 0 : i32
    %c0_i32_1 = arith.constant 0 : i32
    return %arg0, %c0_i32, %c0_i32_0 : i32, i32, i32
  }
}

</mosaic_0001>

<llo_original>
// kernel: tkl1_forward.1
$region0: #{tkl1_forward.1}
  #allocation0 [shape = 'u32[]', space=smem, size = 0x4, offset = 0x4, fixed_abs, tag = 'smem constant byte address 0x4 - core index']
  #allocation1 [shape = 'u32[72,128]{1,0:T(1,128)}', space=vmem, size = 0x9000, scoped, tag = 'internal scratch']
  %s0 = inlined_call_operand.vmem [shape: f32[16], index: 0, kind: input, shape index: {}]
  %s1 = inlined_call_operand.vmem [shape: f32[2,8,32], index: 1, kind: input, shape index: {}]
  %s2 = inlined_call_operand.vmem [shape: f32[2,32,128], index: 2, kind: input, shape index: {}]
  %s3 = inlined_call_operand.vmem [shape: f32[2,8,1], index: 3, kind: input, shape index: {}]
  %s4 = inlined_call_operand.vmem [shape: f32[2,128,128], index: 4, kind: input, shape index: {}]
  %s5 = inlined_call_operand.vmem [shape: f32[2,8,1], index: 5, kind: input, shape index: {}]
  %s6 = inlined_call_operand.vmem [shape: f32[2,1,128], index: 6, kind: input, shape index: {}]
  %s7 = inlined_call_operand.vmem [shape: f32[2,1,128], index: 7, kind: output, shape index: {}]
  %s8 = sld [smem:[#allocation0]]
  $region65: #{tkl1_forward.1} parent=0
    _
  %s10 = ssub.s32 1, %s8
  %s11 = scalar_select 0, %s10, %s8
  $region1: #{tkl1_forward.1} parent=0
    #allocation2 [shape = 'u8[512]{0}', space=smem, size = 0x200, scoped, tag = 'input window, operand 0, single buffered']
    #allocation3 [shape = 's32[2]{0}', space=sflag, size = 0x8, scoped, tag = 'scoped memory for tkl1_forward.1']
    %12 = vsyncpa [#allocation3], 0
    loop: start=0, step=1, limit=4
    $region2: #{tkl1_forward.1} parent=1 // loop_pre_header
      _
    $region3: #{tkl1_forward.1} parent=1 // loop_header
      %s14 = sphi 0, %s18
      %p15 = scmp.ge.s32.totalorder %s14, 4
      %s22 = sphi 0, %s22
      %s24 = sphi 0, %s22
      %s25 = sphi 0, %s24
      %s39 = sphi 0, %s25
      %s45 = sphi 0, %s47
      %s48 = sphi 0, %s45
      %s49 = sphi 0, %s48
      %s65 = sphi 0, %s49
      %s71 = sphi 0, %s73
      %s74 = sphi 0, %s71
      %s75 = sphi 0, %s74
      %s91 = sphi 0, %s75
      %s97 = sphi 0, %s99
      %s100 = sphi 0, %s97
      %s101 = sphi 0, %s100
      %s117 = sphi 0, %s101
      %s123 = sphi 0, %s125
      %s126 = sphi 0, %s123
      %s127 = sphi 0, %s126
      %s143 = sphi 0, %s127
      %s149 = sphi 0, %s151
      %s152 = sphi 0, %s149
      %s153 = sphi 0, %s152
      %s169 = sphi 0, %s153
      %s175 = sphi 0, %s177
      %s178 = sphi 0, %s175
      %s179 = sphi 0, %s178
      %s195 = sphi 0, %s179
      %s201 = sphi 0, %s203
      %s204 = sphi 0, %s201
      %s205 = sphi 0, %s204
      %s221 = sphi 0, %s205
    $region4: #{tkl1_forward.1} parent=1 // loop_header_branch
      %17 = sbr.rel (%p15) target = $region8
    $region5: #{tkl1_forward.1} parent=1 // loop_body
      %s19 = ssub.s32 %s14, 1
      %s20 = ssub.s32 %s14, 2
      %s21 = sadd.s32 %s14, 1
      %s23 = sadd.s32 %s22, 1
      %p26 = scmp.eq.s32.totalorder %s14, 1
      %p27 = scmp.ne.s32.totalorder %s22, %s24
      %p28 = scmp.eq.s32.totalorder %s14, 0
      %p29 = por %p27, %p28
      %p30 = scmp.ne.s32.totalorder %s22, %s24
      %p31 = scmp.eq.s32.totalorder %s19, 1
      %p32 = por %p30, %p31
      %p33 = scmp.ne.s32.totalorder %s24, %s25
      %p34 = scmp.eq.s32.totalorder %s19, 0
      %p35 = por %p33, %p34
      %p36 = scmp.ne.s32.totalorder %s24, %s25
      %p37 = scmp.eq.s32.totalorder %s20, 1
      %p38 = por %p36, %p37
      %p40 = scmp.ne.s32.totalorder %s25, %s39
      %p41 = scmp.eq.s32.totalorder %s20, 0
      %p42 = por %p40, %p41
      %s43 = ssub.s32 %s14, %s21
      %p44 = scmp.eq.s32.totalorder %s43, 0
      %s46 = sadd.s32 %s45, 1
      %s47 = scalar_select %p44, %s45, %s46
      %p50 = pneg %p44
      %p51 = scmp.eq.s32.totalorder %s14, 1
      %p52 = por %p50, %p51
      %p53 = scmp.ne.s32.totalorder %s45, %s48
      %p54 = scmp.eq.s32.totalorder %s14, 0
      %p55 = por %p53, %p54
      %p56 = scmp.ne.s32.totalorder %s45, %s48
      %p57 = scmp.eq.s32.totalorder %s19, 1
      %p58 = por %p56, %p57
      %p59 = scmp.ne.s32.totalorder %s48, %s49
      %p60 = scmp.eq.s32.totalorder %s19, 0
      %p61 = por %p59, %p60
      %p62 = scmp.ne.s32.totalorder %s48, %s49
      %p63 = scmp.eq.s32.totalorder %s20, 1
      %p64 = por %p62, %p63
      %p66 = scmp.ne.s32.totalorder %s49, %s65
      %p67 = scmp.eq.s32.totalorder %s20, 0
      %p68 = por %p66, %p67
      %s69 = ssub.s32 %s14, %s21
      %p70 = scmp.eq.s32.totalorder %s69, 0
      %s72 = sadd.s32 %s71, 1
      %s73 = scalar_select %p70, %s71, %s72
      %p76 = pneg %p70
      %p77 = scmp.eq.s32.totalorder %s14, 1
      %p78 = por %p76, %p77
      %p79 = scmp.ne.s32.totalorder %s71, %s74
      %p80 = scmp.eq.s32.totalorder %s14, 0
      %p81 = por %p79, %p80
      %p82 = scmp.ne.s32.totalorder %s71, %s74
      %p83 = scmp.eq.s32.totalorder %s19, 1
      %p84 = por %p82, %p83
      %p85 = scmp.ne.s32.totalorder %s74, %s75
      %p86 = scmp.eq.s32.totalorder %s19, 0
      %p87 = por %p85, %p86
      %p88 = scmp.ne.s32.totalorder %s74, %s75
      %p89 = scmp.eq.s32.totalorder %s20, 1
      %p90 = por %p88, %p89
      %p92 = scmp.ne.s32.totalorder %s75, %s91
      %p93 = scmp.eq.s32.totalorder %s20, 0
      %p94 = por %p92, %p93
      %s95 = ssub.s32 %s14, %s21
      %p96 = scmp.eq.s32.totalorder %s95, 0
      %s98 = sadd.s32 %s97, 1
      %s99 = scalar_select %p96, %s97, %s98
      %p102 = pneg %p96
      %p103 = scmp.eq.s32.totalorder %s14, 1
      %p104 = por %p102, %p103
      %p105 = scmp.ne.s32.totalorder %s97, %s100
      %p106 = scmp.eq.s32.totalorder %s14, 0
      %p107 = por %p105, %p106
      %p108 = scmp.ne.s32.totalorder %s97, %s100
      %p109 = scmp.eq.s32.totalorder %s19, 1
      %p110 = por %p108, %p109
      %p111 = scmp.ne.s32.totalorder %s100, %s101
      %p112 = scmp.eq.s32.totalorder %s19, 0
      %p113 = por %p111, %p112
      %p114 = scmp.ne.s32.totalorder %s100, %s101
      %p115 = scmp.eq.s32.totalorder %s20, 1
      %p116 = por %p114, %p115
      %p118 = scmp.ne.s32.totalorder %s101, %s117
      %p119 = scmp.eq.s32.totalorder %s20, 0
      %p120 = por %p118, %p119
      %s121 = ssub.s32 %s14, %s21
      %p122 = scmp.eq.s32.totalorder %s121, 0
      %s124 = sadd.s32 %s123, 1
      %s125 = scalar_select %p122, %s123, %s124
      %p128 = pneg %p122
      %p129 = scmp.eq.s32.totalorder %s14, 1
      %p130 = por %p128, %p129
      %p131 = scmp.ne.s32.totalorder %s123, %s126
      %p132 = scmp.eq.s32.totalorder %s14, 0
      %p133 = por %p131, %p132
      %p134 = scmp.ne.s32.totalorder %s123, %s126
      %p135 = scmp.eq.s32.totalorder %s19, 1
      %p136 = por %p134, %p135
      %p137 = scmp.ne.s32.totalorder %s126, %s127
      %p138 = scmp.eq.s32.totalorder %s19, 0
      %p139 = por %p137, %p138
      %p140 = scmp.ne.s32.totalorder %s126, %s127
      %p141 = scmp.eq.s32.totalorder %s20, 1
      %p142 = por %p140, %p141
      %p144 = scmp.ne.s32.totalorder %s127, %s143
      %p145 = scmp.eq.s32.totalorder %s20, 0
      %p146 = por %p144, %p145
      %s147 = ssub.s32 %s14, %s21
      %p148 = scmp.eq.s32.totalorder %s147, 0
      %s150 = sadd.s32 %s149, 1
      %s151 = scalar_select %p148, %s149, %s150
      %p154 = pneg %p148
      %p155 = scmp.eq.s32.totalorder %s14, 1
      %p156 = por %p154, %p155
      %p157 = scmp.ne.s32.totalorder %s149, %s152
      %p158 = scmp.eq.s32.totalorder %s14, 0
      %p159 = por %p157, %p158
      %p160 = scmp.ne.s32.totalorder %s149, %s152
      %p161 = scmp.eq.s32.totalorder %s19, 1
      %p162 = por %p160, %p161
      %p163 = scmp.ne.s32.totalorder %s152, %s153
      %p164 = scmp.eq.s32.totalorder %s19, 0
      %p165 = por %p163, %p164
      %p166 = scmp.ne.s32.totalorder %s152, %s153
      %p167 = scmp.eq.s32.totalorder %s20, 1
      %p168 = por %p166, %p167
      %p170 = scmp.ne.s32.totalorder %s153, %s169
      %p171 = scmp.eq.s32.totalorder %s20, 0
      %p172 = por %p170, %p171
      %s173 = ssub.s32 %s14, %s21
      %p174 = scmp.eq.s32.totalorder %s173, 0
      %s176 = sadd.s32 %s175, 1
      %s177 = scalar_select %p174, %s175, %s176
      %p180 = pneg %p174
      %p181 = scmp.eq.s32.totalorder %s14, 1
      %p182 = por %p180, %p181
      %p183 = scmp.ne.s32.totalorder %s175, %s178
      %p184 = scmp.eq.s32.totalorder %s14, 0
      %p185 = por %p183, %p184
      %p186 = scmp.ne.s32.totalorder %s175, %s178
      %p187 = scmp.eq.s32.totalorder %s19, 1
      %p188 = por %p186, %p187
      %p189 = scmp.ne.s32.totalorder %s178, %s179
      %p190 = scmp.eq.s32.totalorder %s19, 0
      %p191 = por %p189, %p190
      %p192 = scmp.ne.s32.totalorder %s178, %s179
      %p193 = scmp.eq.s32.totalorder %s20, 1
      %p194 = por %p192, %p193
      %p196 = scmp.ne.s32.totalorder %s179, %s195
      %p197 = scmp.eq.s32.totalorder %s20, 0
      %p198 = por %p196, %p197
      %s199 = ssub.s32 %s14, %s21
      %p200 = scmp.eq.s32.totalorder %s199, 0
      %s202 = sadd.s32 %s201, 1
      %s203 = scalar_select %p200, %s201, %s202
      %p206 = pneg %p200
      %p207 = scmp.eq.s32.totalorder %s14, 1
      %p208 = por %p206, %p207
      %p209 = scmp.ne.s32.totalorder %s201, %s204
      %p210 = scmp.eq.s32.totalorder %s14, 0
      %p211 = por %p209, %p210
      %p212 = scmp.ne.s32.totalorder %s201, %s204
      %p213 = scmp.eq.s32.totalorder %s19, 1
      %p214 = por %p212, %p213
      %p215 = scmp.ne.s32.totalorder %s204, %s205
      %p216 = scmp.eq.s32.totalorder %s19, 0
      %p217 = por %p215, %p216
      %p218 = scmp.ne.s32.totalorder %s204, %s205
      %p219 = scmp.eq.s32.totalorder %s20, 1
      %p220 = por %p218, %p219
      %p222 = scmp.ne.s32.totalorder %s205, %s221
      %p223 = scmp.eq.s32.totalorder %s20, 0
      %p224 = por %p222, %p223
      %p225 = scmp.le.s32.totalorder 1, %s14
      %p226 = scmp.lt.s32.totalorder %s14, 3
      %p227 = pnand %p225, %p226
      %p228 = pneg %p227
      // Predicated region
      $region9: #{tkl1_forward.1} parent=5 // pred_check
        _
      $region10: #{tkl1_forward.1} parent=5 // pred_check_branch
        %230 = sbr.rel (%p227) target = $region12
      $region11: #{tkl1_forward.1} parent=5 // pred_region
        %s231 = ssub.s32 %s14, 1
        // Predicated region
        $region13: #{tkl1_forward.1} parent=11 // pred_check
          %p232 = pneg %p35
        $region14: #{tkl1_forward.1} parent=11 // pred_check_branch
          %234 = sbr.rel (%p232) target = $region16
        $region15: #{tkl1_forward.1} parent=11 // pred_region
          %236 = vsyncadd [#allocation3], 0
          %s238 = sshll.u32 %s0, 4
          %s239 = int_to_ptr.vmem [resolvable:$true] %s238
          %241 = dma.vmem_to_smem %s239, 16, [#allocation2], [#allocation3]
        $region16: #{tkl1_forward.1} parent=11 // pred_fallthru
          _
      $region12: #{tkl1_forward.1} parent=5 // pred_fallthru
        _
      %p242 = scmp.lt.s32.totalorder %s14, 2
      // Predicated region
      $region17: #{tkl1_forward.1} parent=5 // pred_check
        %p243 = pneg %p242
      $region18: #{tkl1_forward.1} parent=5 // pred_check_branch
        %245 = sbr.rel (%p243) target = $region20
      $region19: #{tkl1_forward.1} parent=5 // pred_region
        // Predicated region
        $region21: #{tkl1_forward.1} parent=19 // pred_check
          %p246 = pneg %p55
        $region22: #{tkl1_forward.1} parent=19 // pred_check_branch
          %248 = sbr.rel (%p246) target = $region24
        $region23: #{tkl1_forward.1} parent=19 // pred_region
          %p249 = scmp.lt.s32.totalorder %s14, 1
          %s250 = scalar_select %p249, %s14, 1
          %s251 = smul.addr %s250, 8
          %s252 = scalar_lea.vmem %s1, %s251
        $region24: #{tkl1_forward.1} parent=19 // pred_fallthru
          _
        // Predicated region
        $region25: #{tkl1_forward.1} parent=19 // pred_check
          %p253 = pneg %p81
        $region26: #{tkl1_forward.1} parent=19 // pred_check_branch
          %255 = sbr.rel (%p253) target = $region28
        $region27: #{tkl1_forward.1} parent=19 // pred_region
          %p256 = scmp.lt.s32.totalorder %s14, 1
          %s257 = scalar_select %p256, %s14, 1
          %s258 = smul.addr %s257, 4
          %s259 = smul.addr %s258, 8
          %s260 = scalar_lea.vmem %s2, %s259
        $region28: #{tkl1_forward.1} parent=19 // pred_fallthru
          _
        // Predicated region
        $region29: #{tkl1_forward.1} parent=19 // pred_check
          %p261 = pneg %p107
        $region30: #{tkl1_forward.1} parent=19 // pred_check_branch
          %263 = sbr.rel (%p261) target = $region32
        $region31: #{tkl1_forward.1} parent=19 // pred_region
          %p264 = scmp.lt.s32.totalorder %s14, 1
          %s265 = scalar_select %p264, %s14, 1
          %s266 = smul.addr %s265, 8
          %s267 = scalar_lea.vmem %s3, %s266
        $region32: #{tkl1_forward.1} parent=19 // pred_fallthru
          _
        // Predicated region
        $region33: #{tkl1_forward.1} parent=19 // pred_check
          %p268 = pneg %p133
        $region34: #{tkl1_forward.1} parent=19 // pred_check_branch
          %270 = sbr.rel (%p268) target = $region36
        $region35: #{tkl1_forward.1} parent=19 // pred_region
          %p271 = scmp.lt.s32.totalorder %s14, 1
          %s272 = scalar_select %p271, %s14, 1
          %s273 = smul.addr %s272, 16
          %s274 = smul.addr %s273, 8
          %s275 = scalar_lea.vmem %s4, %s274
        $region36: #{tkl1_forward.1} parent=19 // pred_fallthru
          _
        // Predicated region
        $region37: #{tkl1_forward.1} parent=19 // pred_check
          %p276 = pneg %p159
        $region38: #{tkl1_forward.1} parent=19 // pred_check_branch
          %278 = sbr.rel (%p276) target = $region40
        $region39: #{tkl1_forward.1} parent=19 // pred_region
          %p279 = scmp.lt.s32.totalorder %s14, 1
          %s280 = scalar_select %p279, %s14, 1
          %s281 = smul.addr %s280, 8
          %s282 = scalar_lea.vmem %s5, %s281
        $region40: #{tkl1_forward.1} parent=19 // pred_fallthru
          _
        // Predicated region
        $region41: #{tkl1_forward.1} parent=19 // pred_check
          %p283 = pneg %p185
        $region42: #{tkl1_forward.1} parent=19 // pred_check_branch
          %285 = sbr.rel (%p283) target = $region44
        $region43: #{tkl1_forward.1} parent=19 // pred_region
          %p286 = scmp.lt.s32.totalorder %s14, 1
          %s287 = scalar_select %p286, %s14, 1
          %s288 = scalar_lea.vmem %s6, %s287
        $region44: #{tkl1_forward.1} parent=19 // pred_fallthru
          _
      $region20: #{tkl1_forward.1} parent=5 // pred_fallthru
        _
      %p289 = scmp.le.s32.totalorder 1, %s14
      %p290 = scmp.lt.s32.totalorder %s14, 3
      %p291 = pnand %p289, %p290
      %p292 = pneg %p291
      // Predicated region
      $region45: #{tkl1_forward.1} parent=5 // pred_check
        _
      $region46: #{tkl1_forward.1} parent=5 // pred_check_branch
        %294 = sbr.rel (%p291) target = $region48
      $region47: #{tkl1_forward.1} parent=5 // pred_region
        %s295 = ssub.s32 %s14, 1
        // Predicated region
        $region49: #{tkl1_forward.1} parent=47 // pred_check
          %p296 = pneg %p35
        $region50: #{tkl1_forward.1} parent=47 // pred_check_branch
          %298 = sbr.rel (%p296) target = $region52
        $region51: #{tkl1_forward.1} parent=47 // pred_region
          %300 = dma.done [#allocation3], 16
        $region52: #{tkl1_forward.1} parent=47 // pred_fallthru
          _
        %301 = sfence
        %p302 = pneg %p35
        %p303 = pneg %p32
        %p304 = scmp.lt.s32.totalorder %s19, 1
        %s305 = scalar_select %p304, %s19, 1
        %s306 = smul.addr %s305, 8
        %s307 = scalar_lea.vmem %s1, %s306
        %p308 = pneg %p61
        %p309 = pneg %p58
        %p310 = scmp.lt.s32.totalorder %s19, 1
        %s311 = scalar_select %p310, %s19, 1
        %s312 = smul.addr %s311, 4
        %s313 = smul.addr %s312, 8
        %s314 = scalar_lea.vmem %s2, %s313
        %p315 = pneg %p87
        %p316 = pneg %p84
        %p317 = scmp.lt.s32.totalorder %s19, 1
        %s318 = scalar_select %p317, %s19, 1
        %s319 = smul.addr %s318, 8
        %s320 = scalar_lea.vmem %s3, %s319
        %p321 = pneg %p113
        %p322 = pneg %p110
        %p323 = scmp.lt.s32.totalorder %s19, 1
        %s324 = scalar_select %p323, %s19, 1
        %s325 = smul.addr %s324, 16
        %s326 = smul.addr %s325, 8
        %s327 = scalar_lea.vmem %s4, %s326
        %p328 = pneg %p139
        %p329 = pneg %p136
        %p330 = scmp.lt.s32.totalorder %s19, 1
        %s331 = scalar_select %p330, %s19, 1
        %s332 = smul.addr %s331, 8
        %s333 = scalar_lea.vmem %s5, %s332
        %p334 = pneg %p165
        %p335 = pneg %p162
        %p336 = scmp.lt.s32.totalorder %s19, 1
        %s337 = scalar_select %p336, %s19, 1
        %s338 = scalar_lea.vmem %s6, %s337
        %p339 = pneg %p191
        %p340 = pneg %p188
        %p341 = pneg %p217
        %p342 = pneg %p214
        %p343 = scmp.lt.s32.totalorder %s19, 1
        %s344 = scalar_select %p343, %s19, 1
        %s345 = scalar_lea.vmem %s7, %s344
        %p346 = scmp.lt.s32.totalorder %s19, 1
        %s347 = scalar_select %p346, %s19, 1
        %s348 = smul.addr %s347, 8
        %s349 = scalar_lea.vmem %s1, %s348
        %p350 = scmp.lt.s32.totalorder %s19, 1
        %s351 = scalar_select %p350, %s19, 1
        %s352 = smul.addr %s351, 4
        %s353 = smul.addr %s352, 8
        %s354 = scalar_lea.vmem %s2, %s353
        %p355 = scmp.lt.s32.totalorder %s19, 1
        %s356 = scalar_select %p355, %s19, 1
        %s357 = smul.addr %s356, 8
        %s358 = scalar_lea.vmem %s3, %s357
        %p359 = scmp.lt.s32.totalorder %s19, 1
        %s360 = scalar_select %p359, %s19, 1
        %s361 = smul.addr %s360, 16
        %s362 = smul.addr %s361, 8
        %s363 = scalar_lea.vmem %s4, %s362
        %p364 = scmp.lt.s32.totalorder %s19, 1
        %s365 = scalar_select %p364, %s19, 1
        %s366 = smul.addr %s365, 8
        %s367 = scalar_lea.vmem %s5, %s366
        %p368 = scmp.lt.s32.totalorder %s19, 1
        %s369 = scalar_select %p368, %s19, 1
        %s370 = scalar_lea.vmem %s6, %s369
        %p371 = scmp.lt.s32.totalorder %s19, 1
        %s372 = scalar_select %p371, %s19, 1
        %s373 = scalar_lea.vmem %s7, %s372
        %v374 = vld [vmem:[%s349] sm:$0xff]
        %v375 = vld [vmem:[%s354] sm:$0xff]
        %v376 = vld [vmem:[%s354 + $0x8] sm:$0xff]
        %v377 = vld [vmem:[%s354 + $0x10] sm:$0xff]
        %v378 = vld [vmem:[%s354 + $0x18] sm:$0xff]
        %v379 = vld [vmem:[%s358] sm:$0xff]
        %v380 = vld [vmem:[%s363] sm:$0xff]
        %v381 = vld [vmem:[%s363 + $0x8] sm:$0xff]
        %v382 = vld [vmem:[%s363 + $0x10] sm:$0xff]
        %v383 = vld [vmem:[%s363 + $0x18] sm:$0xff]
        %v384 = vld [vmem:[%s363 + $0x20] sm:$0xff]
        %v385 = vld [vmem:[%s363 + $0x28] sm:$0xff]
        %v386 = vld [vmem:[%s363 + $0x30] sm:$0xff]
        %v387 = vld [vmem:[%s363 + $0x38] sm:$0xff]
        %v388 = vld [vmem:[%s363 + $0x40] sm:$0xff]
        %v389 = vld [vmem:[%s363 + $0x48] sm:$0xff]
        %v390 = vld [vmem:[%s363 + $0x50] sm:$0xff]
        %v391 = vld [vmem:[%s363 + $0x58] sm:$0xff]
        %v392 = vld [vmem:[%s363 + $0x60] sm:$0xff]
        %v393 = vld [vmem:[%s363 + $0x68] sm:$0xff]
        %v394 = vld [vmem:[%s363 + $0x70] sm:$0xff]
        %v395 = vld [vmem:[%s363 + $0x78] sm:$0xff]
        %v396 = vld [vmem:[%s367] sm:$0xff]
        %v397 = vld [vmem:[%s370] sm:$0x1]
        %vm398 = vcmask 261120
        %v400 = vsel %vm398, %v374, 0
        %402 = vmatpush.msra.mxu0 0.0
        %403 = vmatpush.msra.mxu0 0.0
        %404 = vmatpush.msra.mxu0 0.0
        %405 = vmatpush.msra.mxu0 0.0
        %406 = vmatpush.msra.mxu0 0.0
        %407 = vmatpush.msra.mxu0 0.0
        %408 = vmatpush.msra.mxu0 0.0
        %409 = vmatpush.msra.mxu0 0.0
        %410 = vmatpush.msra.mxu0 0.0
        %411 = vmatpush.msra.mxu0 0.0
        %412 = vmatpush.msra.mxu0 0.0
        %413 = vmatpush.msra.mxu0 0.0
        %414 = vmatpush.msra.mxu0 %v378
        %415 = vmatpush.msra.mxu0 %v377
        %416 = vmatpush.msra.mxu0 %v376
        %417 = vmatpush.msra.mxu0 %v375
        %418 = vmatmul.f32.gmra.mxu0 %v400
        %v419 = vpop.f32.mrf.mxu0
        %v420 = vadd.f32 0.0, %v419
        %421 = vdwg.mxu0
        %v422 = vsub.f32 %v420, 1.0
        %v423 = vmul.f32 %v422, %v422
        %v424 = vsub.f32 0.0, %v423
        %v425 = vmul.f32 %v424, 50.0
        %v426 = vmul.f32 %v425, 1.442695
        %v427 = vpow.pop %v426
        %v428 = vsub.f32 %v420, 0.7
        %v429 = vmul.f32 %v428, %v428
        %v430 = vsub.f32 0.0, %v429
        %v431 = vmul.f32 %v430, 50.0
        %v432 = vmul.f32 %v431, 1.442695
        %v433 = vpow.pop %v432
        %v434 = vsub.f32 %v420, 0.3
        %v435 = vmul.f32 %v434, %v434
        %v436 = vsub.f32 0.0, %v435
        %v437 = vmul.f32 %v436, 50.0
        %v438 = vmul.f32 %v437, 1.442695
        %v439 = vpow.pop %v438
        %v440 = vsub.f32 %v420, -0.3
        %v441 = vmul.f32 %v440, %v440
        %v442 = vsub.f32 0.0, %v441
        %v443 = vmul.f32 %v442, 50.0
        %v444 = vmul.f32 %v443, 1.442695
        %v445 = vpow.pop %v444
        %v446 = vsub.f32 %v420, -0.7
        %v447 = vmul.f32 %v446, %v446
        %v448 = vsub.f32 0.0, %v447
        %v449 = vmul.f32 %v448, 50.0
        %v450 = vmul.f32 %v449, 1.442695
        %v451 = vpow.pop %v450
        %452 = vmatpush.msra.mxu0 %v395
        %453 = vmatpush.msra.mxu0 %v394
        %454 = vmatpush.msra.mxu0 %v393
        %455 = vmatpush.msra.mxu0 %v392
        %456 = vmatpush.msra.mxu0 %v391
        %457 = vmatpush.msra.mxu0 %v390
        %458 = vmatpush.msra.mxu0 %v389
        %459 = vmatpush.msra.mxu0 %v388
        %460 = vmatpush.msra.mxu0 %v387
        %461 = vmatpush.msra.mxu0 %v386
        %462 = vmatpush.msra.mxu0 %v385
        %463 = vmatpush.msra.mxu0 %v384
        %464 = vmatpush.msra.mxu0 %v383
        %465 = vmatpush.msra.mxu0 %v382
        %466 = vmatpush.msra.mxu0 %v381
        %467 = vmatpush.msra.mxu0 %v380
        %468 = vmatmul.f32.gmra.mxu0 %v427
        %v469 = vpop.f32.mrf.mxu0
        %v470 = vadd.f32 0.0, %v469
        %471 = vmatmul.f32.gmra.mxu0 %v433
        %v472 = vpop.f32.mrf.mxu0
        %v473 = vadd.f32 0.0, %v472
        %474 = vmatmul.f32.gmra.mxu0 %v439
        %v475 = vpop.f32.mrf.mxu0
        %v476 = vadd.f32 0.0, %v475
        %477 = vmatmul.f32.gmra.mxu0 %v445
        %v478 = vpop.f32.mrf.mxu0
        %v479 = vadd.f32 0.0, %v478
        %480 = vmatmul.f32.gmra.mxu0 %v451
        %v481 = vpop.f32.mrf.mxu0
        %v482 = vadd.f32 0.0, %v481
        %483 = vdwg.mxu0
        %v484 = vmax.f32 %v470, 1e-10
        %v485 = vmax.f32 %v473, 1e-10
        %v486 = vmax.f32 %v476, 1e-10
        %v487 = vmax.f32 %v479, 1e-10
        %v488 = vmax.f32 %v482, 1e-10
        %v489 = vlog2.pop %v484
        %v490 = vmul.f32 %v489, 0.6931472
        %v491 = vlog2.pop %v485
        %v492 = vmul.f32 %v491, 0.6931472
        %v493 = vlog2.pop %v486
        %v494 = vmul.f32 %v493, 0.6931472
        %v495 = vlog2.pop %v487
        %v496 = vmul.f32 %v495, 0.6931472
        %v497 = vlog2.pop %v488
        %v498 = vmul.f32 %v497, 0.6931472
        %s499 = sld [smem:[#allocation2]]
        %s500 = sld [smem:[#allocation2 + $0x1]]
        %s501 = sld [smem:[#allocation2 + $0x2]]
        %s502 = sld [smem:[#allocation2 + $0x3]]
        %s503 = sld [smem:[#allocation2 + $0x4]]
        %s504 = sld [smem:[#allocation2 + $0x5]]
        %s505 = sld [smem:[#allocation2 + $0x6]]
        %s506 = sld [smem:[#allocation2 + $0x7]]
        %s507 = sld [smem:[#allocation2 + $0x8]]
        %v508 = vstv %s499
        %v509 = vmul.f32 %v396, %v508
        %v510 = vstv %s500
        %v511 = vmul.f32 %v397, %v510
        %513 = vset.pattern.permute.xlu0 0
        %514 = vperm.xlu0 %513, %v509
        %v515 = vpop.permute.xlu0 %514
        %v518 = vperm.slane %v511, 0
        %v520 = vadd.f32 %v515, %v518
        %v521 = vstv %s501
        %v522 = vadd.f32 %v520, %v521
        %v523 = vstv %s502
        %v524 = vmul.f32 %v396, %v523
        %v525 = vstv %s503
        %v526 = vmul.f32 %v397, %v525
        %528 = vset.pattern.permute.xlu0 0
        %529 = vperm.xlu0 %528, %v524
        %v530 = vpop.permute.xlu0 %529
        %v533 = vperm.slane %v526, 0
        %v535 = vadd.f32 %v530, %v533
        %v536 = vstv %s504
        %v537 = vadd.f32 %v535, %v536
        %v538 = vrcp.pop %v537
        %v539 = vstv %s505
        %v540 = vmul.f32 %v396, %v539
        %v541 = vstv %s506
        %v542 = vmul.f32 %v397, %v541
        %544 = vset.pattern.permute.xlu0 0
        %545 = vperm.xlu0 %544, %v540
        %v546 = vpop.permute.xlu0 %545
        %v549 = vperm.slane %v542, 0
        %v551 = vadd.f32 %v546, %v549
        %v552 = vstv %s507
        %v553 = vadd.f32 %v551, %v552
        %s554 = sld [smem:[#allocation2 + $0x9]]
        %v555 = vmul.f32 %v538, %v490
        %v556 = vmul.f32 %v555, 1.442695
        %v557 = vpow.pop %v556
        %v558 = vstv %s554
        %v559 = vmul.f32 %v558, %v557
        %s560 = sld [smem:[#allocation2 + $0xa]]
        %v561 = vmul.f32 %v538, %v492
        %v562 = vmul.f32 %v561, 1.442695
        %v563 = vpow.pop %v562
        %v564 = vstv %s560
        %v565 = vmul.f32 %v564, %v563
        %v566 = vadd.f32 %v559, %v565
        %s567 = sadd.f32 %s554, %s560
        %s568 = sld [smem:[#allocation2 + $0xb]]
        %v569 = vmul.f32 %v538, %v494
        %v570 = vmul.f32 %v569, 1.442695
        %v571 = vpow.pop %v570
        %v572 = vstv %s568
        %v573 = vmul.f32 %v572, %v571
        %v574 = vadd.f32 %v566, %v573
        %s575 = sadd.f32 %s567, %s568
        %s576 = sld [smem:[#allocation2 + $0xc]]
        %v577 = vmul.f32 %v538, %v496
        %v578 = vmul.f32 %v577, 1.442695
        %v579 = vpow.pop %v578
        %v580 = vstv %s576
        %v581 = vmul.f32 %v580, %v579
        %v582 = vadd.f32 %v574, %v581
        %s583 = sadd.f32 %s575, %s576
        %s584 = sld [smem:[#allocation2 + $0xd]]
        %v585 = vmul.f32 %v538, %v498
        %v586 = vmul.f32 %v585, 1.442695
        %v587 = vpow.pop %v586
        %v588 = vstv %s584
        %v589 = vmul.f32 %v588, %v587
        %v590 = vadd.f32 %v582, %v589
        %s591 = sadd.f32 %s583, %s584
        %v592 = vmul.f32 %v522, %v590
        %v593 = vstv %s591
        %v594 = vmul.f32 %v553, %v593
        %v595 = vsub.f32 %v592, %v594
        %597 = vset.pattern.permute.xlu0 0
        %598 = vperm.xlu0 %597, %v379
        %v599 = vpop.permute.xlu0 %598
        %v601 = vmul.f32 %v595, %v599
        %v602 = vrot.slane %v601, 4
        %v603 = vadd.f32 %v601, %v602
        %v604 = vrot.slane %v603, 2
        %v605 = vadd.f32 %v603, %v604
        %v606 = vrot.slane %v605, 1
        %v607 = vadd.f32 %v605, %v606
        %608 = vst [vmem:[%s373] sm:$0x1] %v607
        %p609 = scmp.lt.s32.totalorder %s19, 1
        %s610 = scalar_select %p609, %s19, 1
        %s611 = scalar_lea.vmem %s7, %s610
        // Predicated region
        $region53: #{tkl1_forward.1} parent=47 // pred_check
          %p612 = pneg %p214
        $region54: #{tkl1_forward.1} parent=47 // pred_check_branch
          %614 = sbr.rel (%p612) target = $region56
        $region55: #{tkl1_forward.1} parent=47 // pred_region
          _
        $region56: #{tkl1_forward.1} parent=47 // pred_fallthru
          _
      $region48: #{tkl1_forward.1} parent=5 // pred_fallthru
        _
      %p615 = scmp.le.s32.totalorder 2, %s14
      // Predicated region
      $region57: #{tkl1_forward.1} parent=5 // pred_check
        %p616 = pneg %p615
      $region58: #{tkl1_forward.1} parent=5 // pred_check_branch
        %618 = sbr.rel (%p616) target = $region60
      $region59: #{tkl1_forward.1} parent=5 // pred_region
        %s619 = ssub.s32 %s14, 2
        // Predicated region
        $region61: #{tkl1_forward.1} parent=59 // pred_check
          %p620 = pneg %p220
        $region62: #{tkl1_forward.1} parent=59 // pred_check_branch
          %622 = sbr.rel (%p620) target = $region64
        $region63: #{tkl1_forward.1} parent=59 // pred_region
          %p623 = scmp.lt.s32.totalorder %s20, 1
          %s624 = scalar_select %p623, %s20, 1
          %s625 = scalar_lea.vmem %s7, %s624
        $region64: #{tkl1_forward.1} parent=59 // pred_fallthru
          _
      $region60: #{tkl1_forward.1} parent=5 // pred_fallthru
        _
    $region6: #{tkl1_forward.1} parent=1 // loop_footer
      %s18 = sadd.s32 1, %s14
    $region7: #{tkl1_forward.1} parent=1 // loop_footer_branch
      %13 = sbr.rel target = $region3
    $region8: #{tkl1_forward.1} parent=1 // loop_exit
      _
    %626 = vsyncpa [#allocation3], 1
    %s627 = scalar_lea.sflag [#allocation3], 1
    %628 = vsyncpa %s627, 1

</llo_original>
